<compile_context>
chip_gen: v5e
topology: v5e:2x2
jax: 0.10.0
libtpu: 0.0.40
codegen_flags: <defaults>
</compile_context>

<pallas_src>
import functools

import jax
import jax.numpy as jnp
from jax.experimental import pallas as pl
from jax.experimental.pallas import tpu as pltpu


def _round_up(x, m):
    return ((x + m - 1) // m) * m


def _powg(base, gamma):
    """base ** gamma with base > 0; integer gamma -> VPU multiplies only."""
    g_int = int(gamma)
    if float(gamma) == float(g_int) and 0 <= g_int <= 8:
        if g_int == 0:
            return jnp.ones_like(base)
        r = base
        for _ in range(g_int - 1):
            r = r * base
        return r
    return jnp.exp(gamma * jnp.log(base))      # base > 0 always (+eps)


def _focal_partial_kernel(pred_ref, tgt_ref, out_ref, *, gamma, num_valid,
                          block_batch, class_axis):
    """Per-block partial sum of focal loss.

    class_axis == 1: pred block (TB, C), target block (TB, 1)   (row layout)
    class_axis == 0: pred block (C, TL), target block (1, TL)   (lane-dense)
    """
    i = pl.program_id(0)
    x = pred_ref[...].astype(jnp.float32)
    t = tgt_ref[...]                                 # int32 class ids
    batch_axis = 1 - class_axis

    # One-hot target mask built in-register (no HBM one-hot).
    cls = jax.lax.broadcasted_iota(jnp.int32, x.shape, class_axis)
    onehot = cls == t

    # Numerically stable softmax pieces over the class axis.
    x_max = jnp.max(x, axis=class_axis, keepdims=True)
    shifted = x - x_max
    shifted_t = jnp.sum(jnp.where(onehot, shifted, 0.0),
                        axis=class_axis, keepdims=True)   # target logit (shifted)
    ex = jnp.exp(shifted)
    denom = jnp.sum(ex, axis=class_axis, keepdims=True)
    inv_denom = 1.0 / denom                          # per-sample, not per-element
    log_denom = jnp.log(denom)

    # Cross-entropy (hard label): -log_softmax at the target class.
    ce = log_denom - shifted_t

    # Focal-weight sum, restructured so the tile-sized path has no select:
    #   sum_c (p_c + eps)^g  -  (p_t + eps)^g  +  (1 - p_t + eps)^g
    p_pow = _powg(ex * inv_denom + 1e-8, gamma)
    s = jnp.sum(p_pow, axis=class_axis, keepdims=True)
    p_t = jnp.exp(shifted_t) * inv_denom
    fw_sum = s - _powg(p_t + 1e-8, gamma) + _powg(1.0 - p_t + 1e-8, gamma)

    # Batch-validity mask (last block may be padded). Padded positions may hold
    # garbage/NaN from the partial DMA; select discards them.
    pos = (jax.lax.broadcasted_iota(jnp.int32, ce.shape, batch_axis)
           + i * block_batch)
    loss = jnp.where(pos < num_valid, ce * fw_sum, 0.0)
    out_ref[0, 0] = jnp.sum(loss)                    # per-block partial sum


def _vmem_budget():
    """(tile working-set budget bytes, vmem_limit_bytes) per TPU generation."""
    try:
        cap = pltpu.get_tpu_info().vmem_capacity_bytes
    except Exception:
        cap = 64 * 1024 * 1024                       # conservative fallback
    if cap >= 96 * 1024 * 1024:                      # v5e / v6e: 128 MiB VMEM
        return 40 * 1024 * 1024, 64 * 1024 * 1024
    return 18 * 1024 * 1024, 32 * 1024 * 1024        # v7x: 64 MiB per TC


def multi_class_focal_loss(pred, target, *, gamma=2.0, loss_weight=1.0,
                           reduction="mean"):
    """JAX/Pallas equivalent of MultiClassFocalLoss.forward.

    pred: (B, C) logits; target: (B,) int class ids in [0, C-1].
    """
    # TODO(synk): reduction='none', soft one-hot float targets, and
    # pred.ndim > 2 (native (B, C, spatial) layout) are not implemented;
    # hard integer labels with 2-D pred only.
    assert reduction in ("mean", "sum")
    assert pred.ndim == 2, "only (B, C) logits with (B,) integer labels"
    B, C = pred.shape
    target = target.reshape(B).astype(jnp.int32)

    itemsize = jnp.dtype(pred.dtype).itemsize
    budget, vmem_limit = _vmem_budget()
    # Peak tile-sized temporaries: ~3 f32 arrays + int32 iota + bool mask.
    f32_copies = 5

    if C < 128:
        # Lane-dense transposed layout: classes on sublanes, batch on lanes.
        sub_native = 32 // itemsize                  # 8 (f32) / 16 (bf16) / 32 (i8)
        c_in = _round_up(C, sub_native)
        c_f32 = _round_up(C, 8)
        per_lane = 2 * c_in * itemsize + f32_copies * c_f32 * 4
        if B <= 128:
            tl = B                                   # block == full dim is legal
        else:
            tl = max(128, (budget // per_lane) // 128 * 128)
            # Keep >= 2 blocks so both v7x TensorCores get work.
            tl = min(tl, _round_up(pl.cdiv(B, 2), 128))
        nb = pl.cdiv(B, tl)
        pred_in = pred.T                             # (C, B): one HBM transpose pass
        tgt_in = target.reshape(1, B)
        in_specs = [pl.BlockSpec((C, tl), lambda i: (0, i)),
                    pl.BlockSpec((1, tl), lambda i: (0, i))]
        class_axis, block_batch = 0, tl
    else:
        # Row layout (lane axis already dense with classes).
        rmul = 32 // itemsize                        # sublane-pack multiple
        c_pad = _round_up(C, 128)                    # lane padding counts!
        per_row = 2 * c_pad * itemsize + f32_copies * c_pad * 4
        tb = max(rmul, (budget // per_row) // rmul * rmul)
        tb = min(tb, _round_up(pl.cdiv(B, 2), rmul))  # >= 2 blocks when possible
        if tb >= B:
            tb = B                                   # block == full dim is legal
        nb = pl.cdiv(B, tb)
        pred_in = pred
        tgt_in = target.reshape(B, 1)
        in_specs = [pl.BlockSpec((tb, C), lambda i: (i, 0)),
                    pl.BlockSpec((tb, 1), lambda i: (i, 0))]
        class_axis, block_batch = 1, tb

    kernel = functools.partial(_focal_partial_kernel, gamma=float(gamma),
                               num_valid=B, block_batch=block_batch,
                               class_axis=class_axis)
    partials = pl.pallas_call(
        kernel,
        out_shape=jax.ShapeDtypeStruct((nb, 1), jnp.float32),
        grid=(nb,),
        in_specs=in_specs,
        out_specs=pl.BlockSpec((1, 1), lambda i: (i, 0),
                               memory_space=pltpu.MemorySpace.SMEM),
        compiler_params=pltpu.CompilerParams(
            dimension_semantics=("parallel",),
            vmem_limit_bytes=vmem_limit),
    )(pred_in, tgt_in)

    total = jnp.sum(partials) * loss_weight
    if reduction == "mean":
        return total / B
    return total


if __name__ == "__main__":
    # __init__ defaults: alpha=0.25 (unused in forward), gamma=2.0,
    # reduction='mean', loss_weight=1.0, pos_weight=[1.0] (unused in forward).
    gamma, loss_weight, reduction = 2.0, 1.0, "mean"

    def ref_loss(pred, target):
        # Pure-JAX reference mirroring the PyTorch forward exactly.
        C = pred.shape[1]
        t1 = jax.nn.one_hot(target, C, dtype=jnp.float32)
        prob = jax.nn.softmax(pred, axis=1)
        logp = jax.nn.log_softmax(pred, axis=1)
        ce = -jnp.sum(t1 * logp, axis=1)
        fw = ((1.0 - prob + 1e-8) * t1 + (prob + 1e-8) * (1.0 - t1)) ** gamma
        return jnp.mean(ce * jnp.sum(fw, axis=1)) * loss_weight

    key = jax.random.PRNGKey(0)
    # (8, 16): small-C lane-dense path, single block.
    # (24, 160): row path with a padded tail block.
    # (300, 16): lane-dense path with a padded tail block.
    for (B, C) in [(8, 16), (24, 160), (300, 16)]:
        key, kp, kt = jax.random.split(key, 3)
        pred = jax.random.normal(kp, (B, C), dtype=jnp.float32)
        target = jax.random.randint(kt, (B,), 0, C, dtype=jnp.int32)

        loss = multi_class_focal_loss(pred, target, gamma=gamma,
                                      loss_weight=loss_weight,
                                      reduction=reduction)
        loss = jax.block_until_ready(loss)
        ref = ref_loss(pred, target)
        assert jnp.allclose(loss, ref, rtol=1e-5, atol=1e-5), (B, C, loss, ref)

    print("KERNEL_OK")
</pallas_src>

<mosaic_0001>
module attributes {stable_mosaic.version = 11 : i64} {
  func.func @_focal_partial_kernel(%arg0: i32, %arg1: memref<16x8xf32, #tpu.memory_space<vmem>>, %arg2: memref<1x8xi32, #tpu.memory_space<vmem>>, %arg3: memref<1x1xf32, #tpu.memory_space<smem>>) attributes {dimension_semantics = [#tpu.dimension_semantics<parallel>], iteration_bounds = array<i64: 1>, scalar_prefetch = 0 : i64, scratch_operands = 0 : i64, tpu.core_type = #tpu.core_type<tc>, window_params = [{transform_indices = @transform_0, window_bounds = array<i64: 16, 8>}, {transform_indices = @transform_1, window_bounds = array<i64: 1, 8>}, {transform_indices = @transform_2, window_bounds = array<i64: 1, 1>}]} {
    %c0 = arith.constant 0 : index
    %c0_0 = arith.constant 0 : index
    %0 = vector.load %arg1[%c0, %c0_0] : memref<16x8xf32, #tpu.memory_space<vmem>>, vector<16x8xf32>
    %c0_1 = arith.constant 0 : index
    %c0_2 = arith.constant 0 : index
    %1 = vector.load %arg2[%c0_1, %c0_2] : memref<1x8xi32, #tpu.memory_space<vmem>>, vector<1x8xi32>
    %2 = tpu.iota {dimensions = array<i32: 0>} : vector<16x8xi32>
    %3 = vector.broadcast %1 : vector<1x8xi32> to vector<16x8xi32>
    %4 = arith.cmpi eq, %2, %3 : vector<16x8xi32>
    %cst = arith.constant dense<0xFF800000> : vector<8xf32>
    %5 = vector.multi_reduction <maximumf>, %0, %cst [0] : vector<16x8xf32> to vector<8xf32>
    %6 = vector.shape_cast %5 : vector<8xf32> to vector<1x8xf32>
    %7 = vector.broadcast %6 : vector<1x8xf32> to vector<16x8xf32>
    %8 = arith.subf %0, %7 : vector<16x8xf32>
    %cst_3 = arith.constant 0.000000e+00 : f32
    %9 = vector.broadcast %cst_3 : f32 to vector<16x8xf32>
    %10 = arith.select %4, %8, %9 : vector<16x8xi1>, vector<16x8xf32>
    %cst_4 = arith.constant dense<0.000000e+00> : vector<8xf32>
    %11 = vector.multi_reduction <add>, %10, %cst_4 [0] : vector<16x8xf32> to vector<8xf32>
    %12 = vector.shape_cast %11 : vector<8xf32> to vector<1x8xf32>
    %13 = math.exp %8 : vector<16x8xf32>
    %cst_5 = arith.constant dense<0.000000e+00> : vector<8xf32>
    %14 = vector.multi_reduction <add>, %13, %cst_5 [0] : vector<16x8xf32> to vector<8xf32>
    %15 = vector.shape_cast %14 : vector<8xf32> to vector<1x8xf32>
    %cst_6 = arith.constant 1.000000e+00 : f32
    %16 = vector.broadcast %cst_6 : f32 to vector<1x8xf32>
    %17 = arith.divf %16, %15 : vector<1x8xf32>
    %18 = math.log %15 : vector<1x8xf32>
    %19 = arith.subf %18, %12 : vector<1x8xf32>
    %20 = vector.broadcast %17 : vector<1x8xf32> to vector<16x8xf32>
    %21 = arith.mulf %13, %20 : vector<16x8xf32>
    %cst_7 = arith.constant 9.99999993E-9 : f32
    %22 = vector.broadcast %cst_7 : f32 to vector<16x8xf32>
    %23 = arith.addf %21, %22 : vector<16x8xf32>
    %24 = arith.mulf %23, %23 : vector<16x8xf32>
    %cst_8 = arith.constant dense<0.000000e+00> : vector<8xf32>
    %25 = vector.multi_reduction <add>, %24, %cst_8 [0] : vector<16x8xf32> to vector<8xf32>
    %26 = vector.shape_cast %25 : vector<8xf32> to vector<1x8xf32>
    %27 = math.exp %12 : vector<1x8xf32>
    %28 = arith.mulf %27, %17 : vector<1x8xf32>
    %cst_9 = arith.constant 9.99999993E-9 : f32
    %29 = vector.broadcast %cst_9 : f32 to vector<1x8xf32>
    %30 = arith.addf %28, %29 : vector<1x8xf32>
    %31 = arith.mulf %30, %30 : vector<1x8xf32>
    %32 = arith.subf %26, %31 : vector<1x8xf32>
    %cst_10 = arith.constant 1.000000e+00 : f32
    %33 = vector.broadcast %cst_10 : f32 to vector<1x8xf32>
    %34 = arith.subf %33, %28 : vector<1x8xf32>
    %cst_11 = arith.constant 9.99999993E-9 : f32
    %35 = vector.broadcast %cst_11 : f32 to vector<1x8xf32>
    %36 = arith.addf %34, %35 : vector<1x8xf32>
    %37 = arith.mulf %36, %36 : vector<1x8xf32>
    %38 = arith.addf %32, %37 : vector<1x8xf32>
    %39 = tpu.iota {dimensions = array<i32: 1>} : vector<1x8xi32>
    %c8_i32 = arith.constant 8 : i32
    %40 = arith.muli %arg0, %c8_i32 : i32
    %41 = vector.broadcast %40 : i32 to vector<1x8xi32>
    %42 = arith.addi %39, %41 : vector<1x8xi32>
    %c8_i32_12 = arith.constant 8 : i32
    %43 = vector.broadcast %c8_i32_12 : i32 to vector<1x8xi32>
    %44 = arith.cmpi slt, %42, %43 : vector<1x8xi32>
    %45 = arith.mulf %19, %38 : vector<1x8xf32>
    %cst_13 = arith.constant 0.000000e+00 : f32
    %46 = vector.broadcast %cst_13 : f32 to vector<1x8xf32>
    %47 = arith.select %44, %45, %46 : vector<1x8xi1>, vector<1x8xf32>
    %48 = vector.shape_cast %47 : vector<1x8xf32> to vector<1x1x8xf32>
    %cst_14 = arith.constant dense<0.000000e+00> : vector<1xf32>
    %49 = vector.multi_reduction <add>, %48, %cst_14 [1, 2] : vector<1x1x8xf32> to vector<1xf32>
    %50 = vector.shape_cast %49 : vector<1xf32> to vector<1x1x1xf32>
    %51 = vector.extract %50[0, 0, 0] : f32 from vector<1x1x1xf32>
    %c0_15 = arith.constant 0 : index
    %c0_16 = arith.constant 0 : index
    %52 = memref.load %arg3[%c0_15, %c0_16] : memref<1x1xf32, #tpu.memory_space<smem>>
    memref.store %51, %arg3[%c0_15, %c0_16] : memref<1x1xf32, #tpu.memory_space<smem>>
    return
  }
  func.func @transform_0(%arg0: i32) -> (i32, i32) {
    %c0_i32 = arith.constant 0 : i32
    %c0_i32_0 = arith.constant 0 : i32
    return %c0_i32, %arg0 : i32, i32
  }
  func.func @transform_1(%arg0: i32) -> (i32, i32) {
    %c0_i32 = arith.constant 0 : i32
    %c0_i32_0 = arith.constant 0 : i32
    return %c0_i32, %arg0 : i32, i32
  }
  func.func @transform_2(%arg0: i32) -> (i32, i32) {
    %c0_i32 = arith.constant 0 : i32
    %c0_i32_0 = arith.constant 0 : i32
    return %arg0, %c0_i32 : i32, i32
  }
}

</mosaic_0001>

<llo_original>
// kernel: tpu_custom_call.1
$region0: #{tpu_custom_call.1}
  #allocation0 [shape = 'u32[]', space=smem, size = 0x4, offset = 0x4, fixed_abs, tag = 'smem constant byte address 0x4 - core index']
  #allocation1 [shape = 'u32[72,128]{1,0:T(1,128)}', space=vmem, size = 0x9000, scoped, tag = 'internal scratch']
  %s0 = inlined_call_operand.vmem [shape: f32[16,8], index: 0, kind: input, shape index: {}]
  %s1 = inlined_call_operand.vmem [shape: s32[1,8], index: 1, kind: input, shape index: {}]
  %s2 = inlined_call_operand.hbm [shape: f32[1,1], index: 2, kind: output, shape index: {}]
  %s3 = sld [smem:[#allocation0]]
  $region18: #{tpu_custom_call.1} parent=0
    _
  %s5 = ssub.s32 1, %s3
  %s6 = scalar_select 0, %s5, %s3
  $region1: #{tpu_custom_call.1} parent=0
    #allocation2 [shape = 'u8[512]{0}', space=smem, size = 0x200, scoped, tag = 'output window, operand 0, single buffered']
    #allocation3 [shape = 's32[1]{0}', space=sflag, size = 0x4, scoped, tag = 'scoped memory for tpu_custom_call.1']
    %7 = vsyncpa [#allocation3], 0
    // Predicated region
    $region2: #{tpu_custom_call.1} parent=1 // pred_check
      _
    $region3: #{tpu_custom_call.1} parent=1 // pred_check_branch
      %9 = sbr.rel (0) target = $region5
    $region4: #{tpu_custom_call.1} parent=1 // pred_region
      _
    $region5: #{tpu_custom_call.1} parent=1 // pred_fallthru
      _
    // Predicated region
    $region6: #{tpu_custom_call.1} parent=1 // pred_check
      _
    $region7: #{tpu_custom_call.1} parent=1 // pred_check_branch
      %11 = sbr.rel (0) target = $region9
    $region8: #{tpu_custom_call.1} parent=1 // pred_region
      _
    $region9: #{tpu_custom_call.1} parent=1 // pred_fallthru
      _
    %v12 = vld [vmem:[%s0] sm:$0xff]
    %v13 = vld [vmem:[%s0 + $0x8] sm:$0xff]
    %v14 = vld [vmem:[%s1] sm:$0x1]
    %v15 = vlaneseq
    %v16 = vshrl.u32 %v15, 7
    %v17 = vadd.s32 %v16, 8
    %v18 = vperm.slane %v14, 0
    %vm19 = vcmp.eq.s32.totalorder %v16, %v18
    %vm20 = vcmp.eq.s32.totalorder %v17, %v18
    %vm21 = vcmask 64512
    %v22 = vsel %vm21, %v12, -inf
    %v23 = vsel %vm21, %v13, -inf
    %v24 = vmax.f32 %v22, %v23
    %v25 = vrot.slane %v24, 4
    %v26 = vmax.f32 %v24, %v25
    %v27 = vrot.slane %v26, 2
    %v28 = vmax.f32 %v26, %v27
    %v29 = vrot.slane %v28, 1
    %v30 = vmax.f32 %v28, %v29
    %v31 = vsub.f32 %v12, %v30
    %v32 = vsub.f32 %v13, %v30
    %v33 = vsel %vm19, %v31, 0.0
    %v34 = vsel %vm20, %v32, 0.0
    %v35 = vsel %vm21, %v33, 0.0
    %v36 = vsel %vm21, %v34, 0.0
    %v37 = vadd.f32 %v35, %v36
    %v38 = vrot.slane %v37, 4
    %v39 = vadd.f32 %v37, %v38
    %v40 = vrot.slane %v39, 2
    %v41 = vadd.f32 %v39, %v40
    %v42 = vrot.slane %v41, 1
    %v43 = vadd.f32 %v41, %v42
    %v44 = vmul.f32 %v31, 1.442695
    %v45 = vpow.pop %v44
    %v46 = vmul.f32 %v32, 1.442695
    %v47 = vpow.pop %v46
    %v48 = vsel %vm21, %v45, 0.0
    %v49 = vsel %vm21, %v47, 0.0
    %v50 = vadd.f32 %v48, %v49
    %v51 = vrot.slane %v50, 4
    %v52 = vadd.f32 %v50, %v51
    %v53 = vrot.slane %v52, 2
    %v54 = vadd.f32 %v52, %v53
    %v55 = vrot.slane %v54, 1
    %v56 = vadd.f32 %v54, %v55
    %v57 = vrcp.pop %v56
    %v58 = vmul.f32 %v56, %v57
    %v59 = vsub.f32 1.0, %v58
    %v60 = vmul.f32 %v57, %v59
    %v61 = vadd.f32 %v57, %v60
    %vm62 = vweird.f32 %v56
    %vm63 = vweird.f32 %v57
    %vm64 = vmor %vm62, %vm63
    %v65 = vsel %vm64, %v57, %v61
    %v66 = vand.u32 2147483647, %v56
    %vm67 = vcmp.eq.f32.partialorder %v66, 8.507059e+37
    %v68 = vand.u32 %v56, 2147483648
    %v69 = vor.u32 1.1754944e-38, %v68
    %v70 = vsel %vm67, %v69, %v65
    %v71 = vmul.f32 1.0, %v70
    %v72 = vlog2.pop %v56
    %v73 = vmul.f32 %v72, 0.6931472
    %v74 = vsub.f32 %v73, %v43
    %v75 = vmul.f32 %v45, %v71
    %v76 = vmul.f32 %v47, %v71
    %v77 = vadd.f32 %v75, 1e-08
    %v78 = vadd.f32 %v76, 1e-08
    %v79 = vmul.f32 %v77, %v77
    %v80 = vmul.f32 %v78, %v78
    %v81 = vsel %vm21, %v79, 0.0
    %v82 = vsel %vm21, %v80, 0.0
    %v83 = vadd.f32 %v81, %v82
    %v84 = vrot.slane %v83, 4
    %v85 = vadd.f32 %v83, %v84
    %v86 = vrot.slane %v85, 2
    %v87 = vadd.f32 %v85, %v86
    %v88 = vrot.slane %v87, 1
    %v89 = vadd.f32 %v87, %v88
    %v90 = vmul.f32 %v43, 1.442695
    %v91 = vpow.pop %v90
    %v92 = vmul.f32 %v91, %v71
    %v93 = vadd.f32 %v92, 1e-08
    %v94 = vmul.f32 %v93, %v93
    %v95 = vsub.f32 %v89, %v94
    %v96 = vsub.f32 1.0, %v92
    %v97 = vadd.f32 %v96, 1e-08
    %v98 = vmul.f32 %v97, %v97
    %v99 = vadd.f32 %v95, %v98
    %v100 = vlaneseq
    %v101 = vand.u32 %v100, 127
    %s102 = smul.u32 0, 8
    %v103 = vstv %s102
    %v104 = vadd.s32 %v101, %v103
    %vm105 = vcmp.lt.s32.totalorder %v104, 8
    %v106 = vmul.f32 %v74, %v99
    %v107 = vsel %vm105, %v106, 0.0
    %vm108 = vcmask 57344
    %v109 = vsel %vm108, %v107, 0.0
    %110 = vadd.xlane.f32.xlu0 %v109
    %v111 = vpop.xlane.xlu0 %110
    %v112 = vrot.slane %v111, 4
    %v113 = vadd.f32 %v111, %v112
    %v114 = vrot.slane %v113, 2
    %v115 = vadd.f32 %v113, %v114
    %v116 = vrot.slane %v115, 1
    %v117 = vadd.f32 %v115, %v116
    %s118 = vtos %v117
    %s119 = scalar_lea.smem [#allocation2], 0
    %120 = sst [smem:[%s119]] %s118
    // Predicated region
    $region10: #{tpu_custom_call.1} parent=1 // pred_check
      _
    $region11: #{tpu_custom_call.1} parent=1 // pred_check_branch
      %122 = sbr.rel (0) target = $region13
    $region12: #{tpu_custom_call.1} parent=1 // pred_region
      %124 = vsyncadd [#allocation3], 0
      %s126 = sshll.u32 %s2, 4
      %s127 = int_to_ptr.hbm [resolvable:$true] %s126
      %129 = dma.smem_to_hbm [#allocation2], 16, %s127, [#allocation3]
    $region13: #{tpu_custom_call.1} parent=1 // pred_fallthru
      _
    // Predicated region
    $region14: #{tpu_custom_call.1} parent=1 // pred_check
      _
    $region15: #{tpu_custom_call.1} parent=1 // pred_check_branch
      %131 = sbr.rel (0) target = $region17
    $region16: #{tpu_custom_call.1} parent=1 // pred_region
      %133 = dma.done [#allocation3], 16
    $region17: #{tpu_custom_call.1} parent=1 // pred_fallthru
      _
    %134 = sfence
    %135 = vsyncpa [#allocation3], 1

</llo_original>
